<compile_context>
chip_gen: v7x
topology: tpu7x:2x2x1
jax: 0.10.0
libtpu: 0.0.40
codegen_flags: <defaults>
</compile_context>

<pallas_src>
import jax
import jax.numpy as jnp
from jax.experimental import pallas as pl
from jax.experimental.pallas import tpu as pltpu

LANES = 128


def _device_kind() -> str:
    try:
        return jax.devices()[0].device_kind.lower()
    except Exception:
        return ""


def _tensorcores_per_chip(kind: str) -> int:
    # v7x (and megacore v4 / v5p) expose 2 TensorCores per device; v5e/v6e: 1.
    if any(tag in kind for tag in ("v7", "7x", "v4", "v5p")):
        return 2
    return 1


def _target_tile_bytes(kind: str) -> int:
    # Per-input, per-pipeline-buffer tile size (2 inputs x 2 buffers total):
    #   v7x : 4 MiB tile -> 16 MiB of buffers (32 MiB scoped-VMEM default)
    #   v6e : 2 MiB tile ->  8 MiB of buffers (32 MiB scoped-VMEM default)
    #   v5e / unknown: 1 MiB tile -> 4 MiB of buffers (16 MiB scoped default)
    if "v7" in kind or "7x" in kind:
        return 4 << 20
    if "v6" in kind:
        return 2 << 20
    return 1 << 20


def _make_mse_kernel(tile_rows, tiles_per_core, n_valid_rows, needs_mask):
    """Per-lane sum of squared differences, accumulated in the output block."""

    def kernel(x_ref, y_ref, o_ref):
        c = pl.program_id(0)   # core split axis ("parallel")
        i = pl.program_id(1)   # reduction axis ("arbitrary", innermost)

        @pl.when(i == 0)
        def _():
            o_ref[...] = jnp.zeros_like(o_ref)

        d = x_ref[...].astype(jnp.float32) - y_ref[...].astype(jnp.float32)
        sq = d * d
        if needs_mask:
            # Zero rows past the end of the real data (ragged last tile and
            # fully out-of-range tiles whose index_map was clamped).
            row0 = (c * tiles_per_core + i) * tile_rows
            rows = row0 + jax.lax.broadcasted_iota(jnp.int32, sq.shape, 0)
            sq = jnp.where(rows < n_valid_rows, sq, jnp.float32(0.0))

        # Per-lane partial sums: sublane reduce + VPU add, hidden under DMA.
        o_ref[...] += jnp.sum(sq, axis=0, keepdims=True).reshape(o_ref.shape)

    return kernel


def mse_loss(inputs, targets):
    assert inputs.shape == targets.shape, "MSELoss requires matching shapes"
    n_elem = inputs.size
    if n_elem == 0:
        # PyTorch returns NaN for empty inputs under mean reduction.
        # TODO(synk): NaN cast is undefined for integer dtypes (edge case only).
        return jnp.array(jnp.nan, dtype=inputs.dtype)

    x = inputs.reshape(-1)
    y = targets.reshape(-1)

    itemsize = jnp.dtype(inputs.dtype).itemsize
    sublane = {4: 8, 2: 16, 1: 32}.get(itemsize, 8)   # packed sublane multiple

    kind = _device_kind()
    n_full_rows = n_elem // LANES
    target_rows = _target_tile_bytes(kind) // (LANES * itemsize)
    tile_rows = min(target_rows, (n_full_rows // sublane) * sublane)

    if tile_rows == 0:
        # Tiny input: not worth a kernel launch.
        d = x.astype(jnp.float32) - y.astype(jnp.float32)
        return (jnp.sum(d * d) * jnp.float32(1.0 / n_elem)).astype(inputs.dtype)

    n_tiles = pl.cdiv(n_full_rows, tile_rows)
    num_cores = _tensorcores_per_chip(kind)
    if n_tiles < num_cores:
        num_cores = 1
    tiles_per_core = pl.cdiv(n_tiles, num_cores)
    covered_rows = num_cores * tiles_per_core * tile_rows
    needs_mask = covered_rows > n_full_rows            # ragged / padded coverage
    has_oob_tiles = num_cores * tiles_per_core > n_tiles

    bulk = n_full_rows * LANES
    if bulk == n_elem:
        # Fully lane-aligned: pure (free) reshape, no HBM copy feeds the kernel.
        x2 = x.reshape(n_full_rows, LANES)
        y2 = y.reshape(n_full_rows, LANES)
    else:
        # Only the <128-element sub-row remainder is handled outside the kernel.
        x2 = x[:bulk].reshape(n_full_rows, LANES)
        y2 = y[:bulk].reshape(n_full_rows, LANES)

    if has_oob_tiles:
        def in_idx(c, i):
            # Clamp fully out-of-range tiles (n_tiles not a multiple of
            # num_cores) onto the last real tile; their rows are masked to 0.
            return (jnp.minimum(c * tiles_per_core + i, n_tiles - 1), 0)
    else:
        def in_idx(c, i):
            return (c * tiles_per_core + i, 0)

    cost = pl.CostEstimate(
        flops=3 * bulk,                                    # sub + mul + add
        transcendentals=0,
        bytes_accessed=2 * bulk * itemsize + num_cores * LANES * 4,
    )

    kernel = _make_mse_kernel(tile_rows, tiles_per_core, n_full_rows, needs_mask)

    partials = pl.pallas_call(
        kernel,
        out_shape=jax.ShapeDtypeStruct((num_cores, 1, LANES), jnp.float32),
        grid_spec=pltpu.PrefetchScalarGridSpec(
            num_scalar_prefetch=0,
            grid=(num_cores, tiles_per_core),
            in_specs=[
                pl.BlockSpec((tile_rows, LANES), in_idx),
                pl.BlockSpec((tile_rows, LANES), in_idx),
            ],
            out_specs=pl.BlockSpec((1, 1, LANES), lambda c, i: (c, 0, 0)),
        ),
        compiler_params=pltpu.CompilerParams(
            # TODO(synk): verify in an xprof trace that the leading core axis
            # shards across both v7x TensorCores; switch to pltpu.CORE_PARALLEL
            # if it runs serially.
            dimension_semantics=("parallel", "arbitrary"),
        ),
        cost_estimate=cost,
    )(x2, y2)

    total = jnp.sum(partials)   # final cross-lane / cross-core reduce (tiny)

    if bulk != n_elem:
        # Ragged sub-row tail (< 128 elements): tiny plain-JAX sum.
        dt = x[bulk:].astype(jnp.float32) - y[bulk:].astype(jnp.float32)
        total = total + jnp.sum(dt * dt)

    # PyTorch returns a 0-d tensor in the input dtype (mean reduction).
    return (total * jnp.float32(1.0 / n_elem)).astype(inputs.dtype)


if __name__ == "__main__":
    key = jax.random.PRNGKey(0)
    k1, k2, k3, k4 = jax.random.split(key, 4)

    # Small NCHW inputs (batch=2, channels=4, 16x16 spatial) — lane-aligned path.
    shape = (2, 4, 16, 16)
    inputs = jax.random.normal(k1, shape, dtype=jnp.float32)
    targets = jax.random.normal(k2, shape, dtype=jnp.float32)

    loss = mse_loss(inputs, targets)
    jax.block_until_ready(loss)
    ref = jnp.mean((inputs - targets) ** 2)
    assert jnp.allclose(loss, ref, rtol=1e-5, atol=1e-6), (loss, ref)

    # Non-128-aligned shape exercises the masked ragged-tile + sub-row tail paths.
    shape2 = (3, 5, 7, 11)
    a = jax.random.normal(k3, shape2, dtype=jnp.float32)
    b = jax.random.normal(k4, shape2, dtype=jnp.float32)
    loss2 = mse_loss(a, b)
    jax.block_until_ready(loss2)
    ref2 = jnp.mean((a - b) ** 2)
    assert jnp.allclose(loss2, ref2, rtol=1e-5, atol=1e-6), (loss2, ref2)

    print("KERNEL_OK")
</pallas_src>

<mosaic_0001>
module attributes {stable_mosaic.version = 11 : i64} {
  func.func @kernel(%arg0: i32, %arg1: i32, %arg2: memref<16x128xf32, #tpu.memory_space<vmem>>, %arg3: memref<16x128xf32, #tpu.memory_space<vmem>>, %arg4: memref<1x1x128xf32, #tpu.memory_space<vmem>>) attributes {dimension_semantics = [#tpu.dimension_semantics<parallel>, #tpu.dimension_semantics<arbitrary>], iteration_bounds = array<i64: 1, 1>, scalar_prefetch = 0 : i64, scratch_operands = 0 : i64, tpu.core_type = #tpu.core_type<tc>, window_params = [{transform_indices = @transform_0, window_bounds = array<i64: 16, 128>}, {transform_indices = @transform_1, window_bounds = array<i64: 16, 128>}, {transform_indices = @transform_2, window_bounds = array<i64: 1, 1, 128>}]} {
    %c0_i32 = arith.constant 0 : i32
    %0 = arith.cmpi eq, %arg1, %c0_i32 : i32
    %1 = arith.extui %0 : i1 to i32
    %c0_i32_0 = arith.constant 0 : i32
    %2 = arith.cmpi ne, %1, %c0_i32_0 : i32
    scf.if %2 {
      %cst_10 = arith.constant 0.000000e+00 : f32
      %13 = vector.broadcast %cst_10 : f32 to vector<1x1x128xf32>
      %c0_11 = arith.constant 0 : index
      %c0_12 = arith.constant 0 : index
      %c0_13 = arith.constant 0 : index
      %14 = vector.load %arg4[%c0_11, %c0_12, %c0_13] : memref<1x1x128xf32, #tpu.memory_space<vmem>>, vector<1x1x128xf32>
      tpu.vector_store %arg4[%c0_11, %c0_12, %c0_13], %13 {strides = array<i32>} : memref<1x1x128xf32, #tpu.memory_space<vmem>>, vector<1x1x128xf32>,
    } else {
    }
    %c0 = arith.constant 0 : index
    %c0_1 = arith.constant 0 : index
    %3 = vector.load %arg2[%c0, %c0_1] : memref<16x128xf32, #tpu.memory_space<vmem>>, vector<16x128xf32>
    %c0_2 = arith.constant 0 : index
    %c0_3 = arith.constant 0 : index
    %4 = vector.load %arg3[%c0_2, %c0_3] : memref<16x128xf32, #tpu.memory_space<vmem>>, vector<16x128xf32>
    %5 = arith.subf %3, %4 : vector<16x128xf32>
    %6 = arith.mulf %5, %5 : vector<16x128xf32>
    %c0_4 = arith.constant 0 : index
    %c0_5 = arith.constant 0 : index
    %c0_6 = arith.constant 0 : index
    %7 = vector.load %arg4[%c0_4, %c0_5, %c0_6] : memref<1x1x128xf32, #tpu.memory_space<vmem>>, vector<1x1x128xf32>
    %cst = arith.constant dense<0.000000e+00> : vector<128xf32>
    %8 = vector.multi_reduction <add>, %6, %cst [0] : vector<16x128xf32> to vector<128xf32>
    %9 = vector.shape_cast %8 : vector<128xf32> to vector<1x128xf32>
    %10 = vector.shape_cast %9 : vector<1x128xf32> to vector<1x1x128xf32>
    %11 = arith.addf %7, %10 : vector<1x1x128xf32>
    %c0_7 = arith.constant 0 : index
    %c0_8 = arith.constant 0 : index
    %c0_9 = arith.constant 0 : index
    %12 = vector.load %arg4[%c0_7, %c0_8, %c0_9] : memref<1x1x128xf32, #tpu.memory_space<vmem>>, vector<1x1x128xf32>
    tpu.vector_store %arg4[%c0_7, %c0_8, %c0_9], %11 {strides = array<i32>} : memref<1x1x128xf32, #tpu.memory_space<vmem>>, vector<1x1x128xf32>,
    return
  }
  func.func @transform_0(%arg0: i32, %arg1: i32) -> (i32, i32) {
    %c1_i32 = arith.constant 1 : i32
    %0 = arith.muli %arg0, %c1_i32 : i32
    %1 = arith.addi %0, %arg1 : i32
    %c0_i32 = arith.constant 0 : i32
    %c0_i32_0 = arith.constant 0 : i32
    return %1, %c0_i32 : i32, i32
  }
  func.func @transform_1(%arg0: i32, %arg1: i32) -> (i32, i32) {
    %c1_i32 = arith.constant 1 : i32
    %0 = arith.muli %arg0, %c1_i32 : i32
    %1 = arith.addi %0, %arg1 : i32
    %c0_i32 = arith.constant 0 : i32
    %c0_i32_0 = arith.constant 0 : i32
    return %1, %c0_i32 : i32, i32
  }
  func.func @transform_2(%arg0: i32, %arg1: i32) -> (i32, i32, i32) {
    %c0_i32 = arith.constant 0 : i32
    %c0_i32_0 = arith.constant 0 : i32
    %c0_i32_1 = arith.constant 0 : i32
    return %arg0, %c0_i32, %c0_i32_0 : i32, i32, i32
  }
}

</mosaic_0001>

<llo_original>
// kernel: tpu_custom_call.1
$region0: #{tpu_custom_call.1}
  #allocation0 [shape = 'u32[]', space=smem, size = 0x4, offset = 0x4, fixed_abs, tag = 'smem constant byte address 0x4 - core index']
  #allocation1 [shape = 'u32[144,128]{1,0:T(1,128)}', space=vmem, size = 0x12000, scoped, tag = 'internal scratch']
  %s0 = inlined_call_operand.hbm [shape: f32[16,128], index: 0, kind: input, shape index: {}]
  %s1 = inlined_call_operand.hbm [shape: f32[16,128], index: 1, kind: input, shape index: {}]
  %s2 = inlined_call_operand.hbm [shape: f32[1,1,128], index: 2, kind: output, shape index: {}]
  %s3 = sld [smem:[#allocation0]]
  $region30: #{tpu_custom_call.1} parent=0
    _
  %s5 = ssub.s32 1, %s3
  %s6 = scalar_select 0, %s5, %s3
  $region1: #{tpu_custom_call.1} parent=0
    #allocation2 [shape = 'u8[8192]{0}', space=vmem, size = 0x2000, scoped, tag = 'input window, operand 0, single buffered']
    #allocation3 [shape = 's32[1]{0}', space=sflag, size = 0x4, scoped, tag = 'scoped memory for tpu_custom_call.1']
    #allocation4 [shape = 's32[1]{0}', space=sflag, size = 0x4, scoped, tag = 'scoped memory for tpu_custom_call.1']
    #allocation5 [shape = 'u8[8192]{0}', space=vmem, size = 0x2000, scoped, tag = 'input window, operand 1, single buffered']
    #allocation6 [shape = 's32[1]{0}', space=sflag, size = 0x4, scoped, tag = 'scoped memory for tpu_custom_call.1']
    #allocation7 [shape = 'u8[512]{0}', space=vmem, size = 0x400, scoped, tag = 'output window, operand 0, single buffered']
    %7 = vsyncpa [#allocation3], 0
    %8 = vsyncpa [#allocation6], 0
    %9 = vsyncpa [#allocation4], 0
    // Predicated region
    $region2: #{tpu_custom_call.1} parent=1 // pred_check
      _
    $region3: #{tpu_custom_call.1} parent=1 // pred_check_branch
      %11 = sbr.rel (0) target = $region5
    $region4: #{tpu_custom_call.1} parent=1 // pred_region
      %s12 = sadd.s32 0, 0
      %s13 = smul.u32 2, %s12
      %s15 = ssub.s32 256, 256
      %16 = vsyncadd [#allocation3], %s15
      %s17 = smul.addr %s13, 128
      %s18 = scalar_lea.hbm %s0, %s17
      %s19 = sshll.u32 [#allocation2], 4
      %s20 = int_to_ptr.vmem [resolvable:$true] %s19
      %25 = dma.hbm_to_vmem [thread:$0]  %s18, 256, %s20, [#allocation3], 128, 128, 8
    $region5: #{tpu_custom_call.1} parent=1 // pred_fallthru
      _
    // Predicated region
    $region6: #{tpu_custom_call.1} parent=1 // pred_check
      _
    $region7: #{tpu_custom_call.1} parent=1 // pred_check_branch
      %27 = sbr.rel (0) target = $region9
    $region8: #{tpu_custom_call.1} parent=1 // pred_region
      %s28 = sadd.s32 0, 0
      %s29 = smul.u32 2, %s28
      %s31 = ssub.s32 256, 256
      %32 = vsyncadd [#allocation6], %s31
      %s33 = smul.addr %s29, 128
      %s34 = scalar_lea.hbm %s1, %s33
      %s35 = sshll.u32 [#allocation5], 4
      %s36 = int_to_ptr.vmem [resolvable:$true] %s35
      %41 = dma.hbm_to_vmem [thread:$0]  %s34, 256, %s36, [#allocation6], 128, 128, 8
    $region9: #{tpu_custom_call.1} parent=1 // pred_fallthru
      _
    // Predicated region
    $region10: #{tpu_custom_call.1} parent=1 // pred_check
      _
    $region11: #{tpu_custom_call.1} parent=1 // pred_check_branch
      %43 = sbr.rel (0) target = $region13
    $region12: #{tpu_custom_call.1} parent=1 // pred_region
      %44 = dma.done [#allocation3], 256
    $region13: #{tpu_custom_call.1} parent=1 // pred_fallthru
      _
    // Predicated region
    $region14: #{tpu_custom_call.1} parent=1 // pred_check
      _
    $region15: #{tpu_custom_call.1} parent=1 // pred_check_branch
      %46 = sbr.rel (0) target = $region17
    $region16: #{tpu_custom_call.1} parent=1 // pred_region
      %47 = dma.done [#allocation6], 256
    $region17: #{tpu_custom_call.1} parent=1 // pred_fallthru
      _
    %s48 = sadd.s32 0, 0
    %s49 = smul.u32 2, %s48
    %s50 = sadd.s32 0, 0
    %s51 = smul.u32 2, %s50
    %p52 = scmp.eq.s32.totalorder 0, 0
    // Predicated region
    $region18: #{tpu_custom_call.1} parent=1 // pred_check
      %p53 = pneg %p52
    $region19: #{tpu_custom_call.1} parent=1 // pred_check_branch
      %55 = sbr.rel (%p53) target = $region21
    $region20: #{tpu_custom_call.1} parent=1 // pred_region
      %56 = vst [vmem:[#allocation7] sm:$0x1] 0.0
    $region21: #{tpu_custom_call.1} parent=1 // pred_fallthru
      _
    %v57 = vld [vmem:[#allocation2] sm:$0xff]
    %v58 = vld [vmem:[#allocation2 + $0x8] sm:$0xff]
    %v59 = vld [vmem:[#allocation5] sm:$0xff]
    %v60 = vld [vmem:[#allocation5 + $0x8] sm:$0xff]
    %v61 = vsub.f32 %v57, %v59
    %v62 = vsub.f32 %v58, %v60
    %v63 = vmul.f32 %v61, %v61
    %v64 = vmul.f32 %v62, %v62
    %v65 = vld [vmem:[#allocation7] sm:$0x1]
    %v66 = vadd.f32 %v63, %v64
    %v67 = vrot.slane %v66, 4
    %v68 = vadd.f32 %v66, %v67
    %v69 = vrot.slane %v68, 2
    %v70 = vadd.f32 %v68, %v69
    %v71 = vrot.slane %v70, 1
    %v72 = vadd.f32 %v70, %v71
    %v73 = vadd.f32 %v65, %v72
    %74 = vst [vmem:[#allocation7] sm:$0x1] %v73
    // Predicated region
    $region22: #{tpu_custom_call.1} parent=1 // pred_check
      _
    $region23: #{tpu_custom_call.1} parent=1 // pred_check_branch
      %76 = sbr.rel (0) target = $region25
    $region24: #{tpu_custom_call.1} parent=1 // pred_region
      %s78 = ssub.s32 16, 16
      %79 = vsyncadd [#allocation4], %s78
      %s81 = sshll.u32 [#allocation7], 4
      %s82 = int_to_ptr.vmem [resolvable:$true] %s81
      %84 = dma.vmem_to_hbm [thread:$0]  %s82, 16, %s2, [#allocation4]
    $region25: #{tpu_custom_call.1} parent=1 // pred_fallthru
      _
    // Predicated region
    $region26: #{tpu_custom_call.1} parent=1 // pred_check
      _
    $region27: #{tpu_custom_call.1} parent=1 // pred_check_branch
      %86 = sbr.rel (0) target = $region29
    $region28: #{tpu_custom_call.1} parent=1 // pred_region
      %87 = dma.done [#allocation4], 16
    $region29: #{tpu_custom_call.1} parent=1 // pred_fallthru
      _
    %88 = vsyncpa [#allocation3], 1
    %89 = vsyncpa [#allocation6], 1
    %90 = vsyncpa [#allocation4], 1

</llo_original>
